<compile_context>
chip_gen: v5e
topology: v5e:2x2
jax: 0.10.0
libtpu: 0.0.40
codegen_flags: <defaults>
</compile_context>

<pallas_src>
import jax
import jax.numpy as jnp
from jax.experimental import pallas as pl
from jax.experimental.pallas import tpu as pltpu


def _pooler_kernel(x_ref, wt_ref, b_ref, o_ref):
    # x_ref : (bb, H)   first-token hidden-state tile
    # wt_ref: (H, tn)   pre-transposed weight tile ([in_features, out_tile])
    # b_ref : (1, tn)   bias tile
    # o_ref : (bb, tn)  output tile
    x = x_ref[...]
    w = wt_ref[...]
    if x.dtype != w.dtype:
        # Keep MXU operands homogeneous (e.g. both bf16 when weights are bf16).
        x = x.astype(w.dtype)
    y = jnp.dot(x, w, preferred_element_type=jnp.float32)
    y = y + b_ref[...].astype(jnp.float32)
    o_ref[...] = jnp.tanh(y).astype(o_ref.dtype)


def prepare_pooler_params(weight, bias, param_dtype=None):
    """One-time parameter prep (call at parameter-load time, NOT per forward).

    Transposes nn.Linear's [out, in] weight to [in, out] so the kernel feeds
    the MXU directly, and optionally down-casts (e.g. to bf16) to halve the
    weight HBM traffic this op is bound on.
    """
    w_t = jnp.asarray(weight).T
    b2d = jnp.asarray(bias).reshape(1, -1)
    if param_dtype is not None:
        w_t = w_t.astype(param_dtype)
    return w_t, b2d


def _default_block_n(H):
    # Dual-TC v7x: even 2-way split so both TensorCores stream half the weight.
    # Single-TC v5e/v6e: one full-H tile (fewest grid steps; weight-DMA bound).
    try:
        kind = jax.devices()[0].device_kind.lower()
    except Exception:  # pragma: no cover - defensive
        kind = ""
    dual_tc = ("v7" in kind) or ("7x" in kind)
    if dual_tc and H % 256 == 0:
        return H // 2
    return H


def _default_block_b(B, H, itemsize, max_bytes=2 << 20):
    # Keep the resident x block to a few MiB; tile B only for very large batches.
    if B <= 8 or B * H * itemsize <= max_bytes:
        return B
    bb = max(8, (max_bytes // (H * itemsize)) // 8 * 8)
    while bb > 8 and B % bb:
        bb -= 8
    return bb if (B % bb == 0) else B


def bert_pooler(hidden_states, w_t, bias2d, *, block_n=None, block_b=None):
    """hidden_states: [B, S, H]; w_t: [H, H] pre-transposed ([in, out]);
    bias2d: [1, H].  Returns tanh(hidden_states[:, 0] @ W.T + b): [B, H]."""
    B, S, H = hidden_states.shape
    assert w_t.shape == (H, H) and bias2d.shape == (1, H)

    x_isz = jnp.dtype(hidden_states.dtype).itemsize
    w_isz = jnp.dtype(w_t.dtype).itemsize
    b_isz = jnp.dtype(bias2d.dtype).itemsize

    # Output-H tile (lane axis): must divide H and stay a multiple of 128
    # unless it is the full H.
    tn = block_n or _default_block_n(H)
    if (H % tn) or (tn != H and tn % 128):
        tn = H
    # Batch tile: multiple of 8 unless it is the full B.
    bb = block_b or _default_block_b(B, H, x_isz)
    if (B % bb) or (bb != B and bb % 8):
        bb = B
    n_b, n_n = B // bb, H // tn

    # First-token selection. When H is a multiple of 128 the slice is folded
    # into the kernel DMA via a free (B, S*H) view: column block 0 of width H
    # is exactly hidden_states[:, 0, :]. Otherwise slice once on the XLA side.
    if H % 128 == 0:
        x_in = hidden_states.reshape(B, S * H)
    else:
        x_in = hidden_states[:, 0, :]

    # Per-grid-step working set (double-buffered) + headroom; tiles are small,
    # so this stays far under every chip's scoped VMEM budget.
    blk_bytes = bb * H * x_isz + H * tn * w_isz + tn * b_isz + bb * tn * x_isz
    vmem_limit = int(min(max(2 * blk_bytes + (4 << 20), 8 << 20), 32 << 20))

    cost = pl.CostEstimate(
        flops=2 * B * H * H,
        transcendentals=B * H,
        bytes_accessed=H * H * w_isz + 2 * B * H * x_isz + H * b_isz,
    )

    return pl.pallas_call(
        _pooler_kernel,
        out_shape=jax.ShapeDtypeStruct((B, H), hidden_states.dtype),
        grid_spec=pltpu.PrefetchScalarGridSpec(
            num_scalar_prefetch=0,
            grid=(n_b, n_n),
            in_specs=[
                pl.BlockSpec((bb, H), lambda i, j: (i, 0)),   # x tile (col blk 0)
                pl.BlockSpec((H, tn), lambda i, j: (0, j)),   # streamed weight
                pl.BlockSpec((1, tn), lambda i, j: (0, j)),   # bias tile
            ],
            out_specs=pl.BlockSpec((bb, tn), lambda i, j: (i, j)),
        ),
        compiler_params=pltpu.CompilerParams(
            dimension_semantics=("parallel", "parallel"),
            vmem_limit_bytes=vmem_limit,
        ),
        cost_estimate=cost,
    )(x_in, w_t, bias2d)


if __name__ == "__main__":
    key = jax.random.PRNGKey(0)
    # Small, vreg-friendly test shapes: B multiple of 8, H multiple of 128.
    B, S, H = 8, 8, 256

    k_x, k_w, k_b = jax.random.split(key, 3)
    hidden_states = jax.random.normal(k_x, (B, S, H), dtype=jnp.float32)
    # Deterministic synthetic parameters (same shapes as nn.Linear(H, H)).
    weight = jax.random.normal(k_w, (H, H), dtype=jnp.float32) * 0.05
    bias = jax.random.normal(k_b, (H,), dtype=jnp.float32) * 0.05

    # One-time parameter prep (outside the hot path). Pass
    # param_dtype=jnp.bfloat16 here to halve weight-HBM traffic in production.
    w_t, b2d = prepare_pooler_params(weight, bias)

    out = jax.block_until_ready(bert_pooler(hidden_states, w_t, b2d))

    # Pure-JAX reference check.
    ref = jnp.tanh(hidden_states[:, 0, :] @ weight.T + bias)
    assert out.shape == (B, H)
    err = float(jnp.max(jnp.abs(out - ref)))
    assert jnp.allclose(out, ref, atol=2e-3, rtol=2e-3), err

    print("KERNEL_OK")
</pallas_src>

<mosaic_0001>
module attributes {stable_mosaic.version = 11 : i64} {
  func.func @_pooler_kernel(%arg0: i32, %arg1: i32, %arg2: memref<8x256xf32, #tpu.memory_space<vmem>>, %arg3: memref<256x256xf32, #tpu.memory_space<vmem>>, %arg4: memref<1x256xf32, #tpu.memory_space<vmem>>, %arg5: memref<8x256xf32, #tpu.memory_space<vmem>>) attributes {dimension_semantics = [#tpu.dimension_semantics<parallel>, #tpu.dimension_semantics<parallel>], iteration_bounds = array<i64: 1, 1>, scalar_prefetch = 0 : i64, scratch_operands = 0 : i64, tpu.core_type = #tpu.core_type<tc>, window_params = [{transform_indices = @transform_0, window_bounds = array<i64: 8, 256>}, {transform_indices = @transform_1, window_bounds = array<i64: 256, 256>}, {transform_indices = @transform_2, window_bounds = array<i64: 1, 256>}, {transform_indices = @transform_3, window_bounds = array<i64: 8, 256>}]} {
    %c0 = arith.constant 0 : index
    %c0_0 = arith.constant 0 : index
    %0 = vector.load %arg2[%c0, %c0_0] : memref<8x256xf32, #tpu.memory_space<vmem>>, vector<8x256xf32>
    %c0_1 = arith.constant 0 : index
    %c0_2 = arith.constant 0 : index
    %1 = vector.load %arg3[%c0_1, %c0_2] : memref<256x256xf32, #tpu.memory_space<vmem>>, vector<256x256xf32>
    %cst = arith.constant dense<0.000000e+00> : vector<8x256xf32>
    %2 = tpu.matmul %0, %1, %cst {dimension_numbers = #tpu.dot_dimension_numbers<[1], [0], [0], [1], [0, 0, 1, 1], [], []>} : vector<8x256xf32>, vector<256x256xf32>, vector<8x256xf32> -> vector<8x256xf32>
    %c0_3 = arith.constant 0 : index
    %c0_4 = arith.constant 0 : index
    %3 = vector.load %arg4[%c0_3, %c0_4] : memref<1x256xf32, #tpu.memory_space<vmem>>, vector<1x256xf32>
    %4 = vector.broadcast %3 : vector<1x256xf32> to vector<8x256xf32>
    %5 = arith.addf %2, %4 : vector<8x256xf32>
    %6 = math.tanh %5 : vector<8x256xf32>
    %c0_5 = arith.constant 0 : index
    %c0_6 = arith.constant 0 : index
    %7 = vector.load %arg5[%c0_5, %c0_6] : memref<8x256xf32, #tpu.memory_space<vmem>>, vector<8x256xf32>
    tpu.vector_store %arg5[%c0_5, %c0_6], %6 {strides = array<i32>} : memref<8x256xf32, #tpu.memory_space<vmem>>, vector<8x256xf32>,
    return
  }
  func.func @transform_0(%arg0: i32, %arg1: i32) -> (i32, i32) {
    %c0_i32 = arith.constant 0 : i32
    %c0_i32_0 = arith.constant 0 : i32
    return %arg0, %c0_i32 : i32, i32
  }
  func.func @transform_1(%arg0: i32, %arg1: i32) -> (i32, i32) {
    %c0_i32 = arith.constant 0 : i32
    %c0_i32_0 = arith.constant 0 : i32
    return %c0_i32, %arg1 : i32, i32
  }
  func.func @transform_2(%arg0: i32, %arg1: i32) -> (i32, i32) {
    %c0_i32 = arith.constant 0 : i32
    %c0_i32_0 = arith.constant 0 : i32
    return %c0_i32, %arg1 : i32, i32
  }
  func.func @transform_3(%arg0: i32, %arg1: i32) -> (i32, i32) {
    %c0_i32 = arith.constant 0 : i32
    return %arg0, %arg1 : i32, i32
  }
}

</mosaic_0001>

<llo_original>
// kernel: tpu_custom_call.1
$region0: #{tpu_custom_call.1}
  #allocation0 [shape = 'u32[]', space=smem, size = 0x4, offset = 0x4, fixed_abs, tag = 'smem constant byte address 0x4 - core index']
  #allocation1 [shape = 'u32[72,128]{1,0:T(1,128)}', space=vmem, size = 0x9000, scoped, tag = 'internal scratch']
  %s0 = inlined_call_operand.hbm [shape: f32[8,2048], index: 0, kind: input, shape index: {}]
  %s1 = inlined_call_operand.hbm [shape: f32[256,256], index: 1, kind: input, shape index: {}]
  %s2 = inlined_call_operand.hbm [shape: f32[1,256], index: 2, kind: input, shape index: {}]
  %s3 = inlined_call_operand.hbm [shape: f32[8,256], index: 3, kind: output, shape index: {}]
  %s4 = sld [smem:[#allocation0]]
  $region34: #{tpu_custom_call.1} parent=0
    _
  %s6 = ssub.s32 1, %s4
  %s7 = scalar_select 0, %s6, %s4
  $region1: #{tpu_custom_call.1} parent=0
    #allocation2 [shape = 'u8[8192]{0}', space=vmem, size = 0x2000, scoped, tag = 'input window, operand 0, single buffered']
    #allocation3 [shape = 's32[1]{0}', space=sflag, size = 0x4, scoped, tag = 'scoped memory for tpu_custom_call.1']
    #allocation4 [shape = 's32[1]{0}', space=sflag, size = 0x4, scoped, tag = 'scoped memory for tpu_custom_call.1']
    #allocation5 [shape = 'u8[262144]{0}', space=vmem, size = 0x40000, scoped, tag = 'input window, operand 1, single buffered']
    #allocation6 [shape = 's32[1]{0}', space=sflag, size = 0x4, scoped, tag = 'scoped memory for tpu_custom_call.1']
    #allocation7 [shape = 'u8[1024]{0}', space=vmem, size = 0x400, scoped, tag = 'input window, operand 2, single buffered']
    #allocation8 [shape = 'u8[8192]{0}', space=vmem, size = 0x2000, scoped, tag = 'output window, operand 0, single buffered']
    %8 = vsyncpa [#allocation3], 0
    %9 = vsyncpa [#allocation6], 0
    %10 = vsyncpa [#allocation4], 0
    // Predicated region
    $region2: #{tpu_custom_call.1} parent=1 // pred_check
      _
    $region3: #{tpu_custom_call.1} parent=1 // pred_check_branch
      %12 = sbr.rel (0) target = $region5
    $region4: #{tpu_custom_call.1} parent=1 // pred_region
      %14 = vsyncadd [#allocation3], 0
      %s16 = sshll.u32 %s0, 4
      %s17 = int_to_ptr.hbm [resolvable:$true] %s16
      %s18 = sshll.u32 [#allocation2], 4
      %s19 = int_to_ptr.vmem [resolvable:$true] %s18
      %21 = dma.hbm_to_vmem [thread:$0]  %s17, 256, %s19, [#allocation3]
    $region5: #{tpu_custom_call.1} parent=1 // pred_fallthru
      _
    // Predicated region
    $region6: #{tpu_custom_call.1} parent=1 // pred_check
      _
    $region7: #{tpu_custom_call.1} parent=1 // pred_check_branch
      %23 = sbr.rel (0) target = $region9
    $region8: #{tpu_custom_call.1} parent=1 // pred_region
      %25 = vsyncadd [#allocation6], 0
      %s26 = sshll.u32 %s1, 4
      %s27 = int_to_ptr.hbm [resolvable:$true] %s26
      %s28 = sshll.u32 [#allocation5], 4
      %s29 = int_to_ptr.vmem [resolvable:$true] %s28
      %34 = dma.hbm_to_vmem [thread:$0]  %s27, 8192, %s29, [#allocation6], 256, 256, 16
    $region9: #{tpu_custom_call.1} parent=1 // pred_fallthru
      _
    // Predicated region
    $region10: #{tpu_custom_call.1} parent=1 // pred_check
      _
    $region11: #{tpu_custom_call.1} parent=1 // pred_check_branch
      %36 = sbr.rel (0) target = $region13
    $region12: #{tpu_custom_call.1} parent=1 // pred_region
      %38 = vsyncadd [#allocation6], 0
      %s40 = sshll.u32 %s2, 4
      %s41 = int_to_ptr.hbm [resolvable:$true] %s40
      %s42 = sshll.u32 [#allocation7], 4
      %s43 = int_to_ptr.vmem [resolvable:$true] %s42
      %45 = dma.hbm_to_vmem [thread:$0]  %s41, 32, %s43, [#allocation6]
    $region13: #{tpu_custom_call.1} parent=1 // pred_fallthru
      _
    // Predicated region
    $region14: #{tpu_custom_call.1} parent=1 // pred_check
      _
    $region15: #{tpu_custom_call.1} parent=1 // pred_check_branch
      %47 = sbr.rel (0) target = $region17
    $region16: #{tpu_custom_call.1} parent=1 // pred_region
      %49 = dma.done [#allocation3], 256
    $region17: #{tpu_custom_call.1} parent=1 // pred_fallthru
      _
    // Predicated region
    $region18: #{tpu_custom_call.1} parent=1 // pred_check
      _
    $region19: #{tpu_custom_call.1} parent=1 // pred_check_branch
      %51 = sbr.rel (0) target = $region21
    $region20: #{tpu_custom_call.1} parent=1 // pred_region
      %53 = dma.done [#allocation6], 8192
    $region21: #{tpu_custom_call.1} parent=1 // pred_fallthru
      _
    // Predicated region
    $region22: #{tpu_custom_call.1} parent=1 // pred_check
      _
    $region23: #{tpu_custom_call.1} parent=1 // pred_check_branch
      %55 = sbr.rel (0) target = $region25
    $region24: #{tpu_custom_call.1} parent=1 // pred_region
      %57 = dma.done [#allocation6], 32
    $region25: #{tpu_custom_call.1} parent=1 // pred_fallthru
      _
    %v58 = vld [vmem:[#allocation2] sm:$0xff]
    %v59 = vld [vmem:[#allocation2 + $0x8] sm:$0xff]
    %v60 = vld [vmem:[#allocation5] sm:$0xff]
    %v61 = vld [vmem:[#allocation5 + $0x8] sm:$0xff]
    %v62 = vld [vmem:[#allocation5 + $0x10] sm:$0xff]
    %v63 = vld [vmem:[#allocation5 + $0x18] sm:$0xff]
    %v64 = vld [vmem:[#allocation5 + $0x20] sm:$0xff]
    %v65 = vld [vmem:[#allocation5 + $0x28] sm:$0xff]
    %v66 = vld [vmem:[#allocation5 + $0x30] sm:$0xff]
    %v67 = vld [vmem:[#allocation5 + $0x38] sm:$0xff]
    %v68 = vld [vmem:[#allocation5 + $0x40] sm:$0xff]
    %v69 = vld [vmem:[#allocation5 + $0x48] sm:$0xff]
    %v70 = vld [vmem:[#allocation5 + $0x50] sm:$0xff]
    %v71 = vld [vmem:[#allocation5 + $0x58] sm:$0xff]
    %v72 = vld [vmem:[#allocation5 + $0x60] sm:$0xff]
    %v73 = vld [vmem:[#allocation5 + $0x68] sm:$0xff]
    %v74 = vld [vmem:[#allocation5 + $0x70] sm:$0xff]
    %v75 = vld [vmem:[#allocation5 + $0x78] sm:$0xff]
    %v76 = vld [vmem:[#allocation5 + $0x80] sm:$0xff]
    %v77 = vld [vmem:[#allocation5 + $0x88] sm:$0xff]
    %v78 = vld [vmem:[#allocation5 + $0x90] sm:$0xff]
    %v79 = vld [vmem:[#allocation5 + $0x98] sm:$0xff]
    %v80 = vld [vmem:[#allocation5 + $0xa0] sm:$0xff]
    %v81 = vld [vmem:[#allocation5 + $0xa8] sm:$0xff]
    %v82 = vld [vmem:[#allocation5 + $0xb0] sm:$0xff]
    %v83 = vld [vmem:[#allocation5 + $0xb8] sm:$0xff]
    %v84 = vld [vmem:[#allocation5 + $0xc0] sm:$0xff]
    %v85 = vld [vmem:[#allocation5 + $0xc8] sm:$0xff]
    %v86 = vld [vmem:[#allocation5 + $0xd0] sm:$0xff]
    %v87 = vld [vmem:[#allocation5 + $0xd8] sm:$0xff]
    %v88 = vld [vmem:[#allocation5 + $0xe0] sm:$0xff]
    %v89 = vld [vmem:[#allocation5 + $0xe8] sm:$0xff]
    %v90 = vld [vmem:[#allocation5 + $0xf0] sm:$0xff]
    %v91 = vld [vmem:[#allocation5 + $0xf8] sm:$0xff]
    %v92 = vld [vmem:[#allocation5 + $0x100] sm:$0xff]
    %v93 = vld [vmem:[#allocation5 + $0x108] sm:$0xff]
    %v94 = vld [vmem:[#allocation5 + $0x110] sm:$0xff]
    %v95 = vld [vmem:[#allocation5 + $0x118] sm:$0xff]
    %v96 = vld [vmem:[#allocation5 + $0x120] sm:$0xff]
    %v97 = vld [vmem:[#allocation5 + $0x128] sm:$0xff]
    %v98 = vld [vmem:[#allocation5 + $0x130] sm:$0xff]
    %v99 = vld [vmem:[#allocation5 + $0x138] sm:$0xff]
    %v100 = vld [vmem:[#allocation5 + $0x140] sm:$0xff]
    %v101 = vld [vmem:[#allocation5 + $0x148] sm:$0xff]
    %v102 = vld [vmem:[#allocation5 + $0x150] sm:$0xff]
    %v103 = vld [vmem:[#allocation5 + $0x158] sm:$0xff]
    %v104 = vld [vmem:[#allocation5 + $0x160] sm:$0xff]
    %v105 = vld [vmem:[#allocation5 + $0x168] sm:$0xff]
    %v106 = vld [vmem:[#allocation5 + $0x170] sm:$0xff]
    %v107 = vld [vmem:[#allocation5 + $0x178] sm:$0xff]
    %v108 = vld [vmem:[#allocation5 + $0x180] sm:$0xff]
    %v109 = vld [vmem:[#allocation5 + $0x188] sm:$0xff]
    %v110 = vld [vmem:[#allocation5 + $0x190] sm:$0xff]
    %v111 = vld [vmem:[#allocation5 + $0x198] sm:$0xff]
    %v112 = vld [vmem:[#allocation5 + $0x1a0] sm:$0xff]
    %v113 = vld [vmem:[#allocation5 + $0x1a8] sm:$0xff]
    %v114 = vld [vmem:[#allocation5 + $0x1b0] sm:$0xff]
    %v115 = vld [vmem:[#allocation5 + $0x1b8] sm:$0xff]
    %v116 = vld [vmem:[#allocation5 + $0x1c0] sm:$0xff]
    %v117 = vld [vmem:[#allocation5 + $0x1c8] sm:$0xff]
    %v118 = vld [vmem:[#allocation5 + $0x1d0] sm:$0xff]
    %v119 = vld [vmem:[#allocation5 + $0x1d8] sm:$0xff]
    %v120 = vld [vmem:[#allocation5 + $0x1e0] sm:$0xff]
    %v121 = vld [vmem:[#allocation5 + $0x1e8] sm:$0xff]
    %v122 = vld [vmem:[#allocation5 + $0x1f0] sm:$0xff]
    %v123 = vld [vmem:[#allocation5 + $0x1f8] sm:$0xff]
    %v124 = vld [vmem:[#allocation7] sm:$0x3]
    %v126 = vperm.slane %v124, 0
    %v127 = vperm.slane %v124, 1
    %130 = vmatpush.msra.mxu0 %v90
    %131 = vmatpush.msra.mxu0 %v88
    %132 = vmatpush.msra.mxu0 %v86
    %133 = vmatpush.msra.mxu0 %v84
    %134 = vmatpush.msra.mxu0 %v82
    %135 = vmatpush.msra.mxu0 %v80
    %136 = vmatpush.msra.mxu0 %v78
    %137 = vmatpush.msra.mxu0 %v76
    %138 = vmatpush.msra.mxu0 %v74
    %139 = vmatpush.msra.mxu0 %v72
    %140 = vmatpush.msra.mxu0 %v70
    %141 = vmatpush.msra.mxu0 %v68
    %142 = vmatpush.msra.mxu0 %v66
    %143 = vmatpush.msra.mxu0 %v64
    %144 = vmatpush.msra.mxu0 %v62
    %145 = vmatpush.msra.mxu0 %v60
    %146 = vmatmul.f32.gmra.mxu0 %v58
    %v147 = vpop.f32.mrf.mxu0
    %v148 = vadd.f32 %v126, %v147
    %149 = vdwg.mxu0
    %150 = vmatpush.msra.mxu0 %v122
    %151 = vmatpush.msra.mxu0 %v120
    %152 = vmatpush.msra.mxu0 %v118
    %153 = vmatpush.msra.mxu0 %v116
    %154 = vmatpush.msra.mxu0 %v114
    %155 = vmatpush.msra.mxu0 %v112
    %156 = vmatpush.msra.mxu0 %v110
    %157 = vmatpush.msra.mxu0 %v108
    %158 = vmatpush.msra.mxu0 %v106
    %159 = vmatpush.msra.mxu0 %v104
    %160 = vmatpush.msra.mxu0 %v102
    %161 = vmatpush.msra.mxu0 %v100
    %162 = vmatpush.msra.mxu0 %v98
    %163 = vmatpush.msra.mxu0 %v96
    %164 = vmatpush.msra.mxu0 %v94
    %165 = vmatpush.msra.mxu0 %v92
    %166 = vmatmul.f32.gmra.mxu0 %v59
    %v167 = vpop.f32.mrf.mxu0
    %v168 = vadd.f32 %v148, %v167
    %169 = vdwg.mxu0
    %170 = vmatpush.msra.mxu0 %v91
    %171 = vmatpush.msra.mxu0 %v89
    %172 = vmatpush.msra.mxu0 %v87
    %173 = vmatpush.msra.mxu0 %v85
    %174 = vmatpush.msra.mxu0 %v83
    %175 = vmatpush.msra.mxu0 %v81
    %176 = vmatpush.msra.mxu0 %v79
    %177 = vmatpush.msra.mxu0 %v77
    %178 = vmatpush.msra.mxu0 %v75
    %179 = vmatpush.msra.mxu0 %v73
    %180 = vmatpush.msra.mxu0 %v71
    %181 = vmatpush.msra.mxu0 %v69
    %182 = vmatpush.msra.mxu0 %v67
    %183 = vmatpush.msra.mxu0 %v65
    %184 = vmatpush.msra.mxu0 %v63
    %185 = vmatpush.msra.mxu0 %v61
    %186 = vmatmul.f32.gmra.mxu0 %v58
    %v187 = vpop.f32.mrf.mxu0
    %v188 = vadd.f32 %v127, %v187
    %189 = vdwg.mxu0
    %190 = vmatpush.msra.mxu0 %v123
    %191 = vmatpush.msra.mxu0 %v121
    %192 = vmatpush.msra.mxu0 %v119
    %193 = vmatpush.msra.mxu0 %v117
    %194 = vmatpush.msra.mxu0 %v115
    %195 = vmatpush.msra.mxu0 %v113
    %196 = vmatpush.msra.mxu0 %v111
    %197 = vmatpush.msra.mxu0 %v109
    %198 = vmatpush.msra.mxu0 %v107
    %199 = vmatpush.msra.mxu0 %v105
    %200 = vmatpush.msra.mxu0 %v103
    %201 = vmatpush.msra.mxu0 %v101
    %202 = vmatpush.msra.mxu0 %v99
    %203 = vmatpush.msra.mxu0 %v97
    %204 = vmatpush.msra.mxu0 %v95
    %205 = vmatpush.msra.mxu0 %v93
    %206 = vmatmul.f32.gmra.mxu0 %v59
    %v207 = vpop.f32.mrf.mxu0
    %v208 = vadd.f32 %v188, %v207
    %209 = vdwg.mxu0
    %v210 = vtanh.pop %v168
    %v211 = vtanh.pop %v208
    %212 = vst [vmem:[#allocation8] sm:$0xff] %v210
    %213 = vst [vmem:[#allocation8 + $0x8] sm:$0xff] %v211
    // Predicated region
    $region26: #{tpu_custom_call.1} parent=1 // pred_check
      _
    $region27: #{tpu_custom_call.1} parent=1 // pred_check_branch
      %215 = sbr.rel (0) target = $region29
    $region28: #{tpu_custom_call.1} parent=1 // pred_region
      %217 = vsyncadd [#allocation4], 0
      %s219 = sshll.u32 [#allocation8], 4
      %s220 = int_to_ptr.vmem [resolvable:$true] %s219
      %s221 = sshll.u32 %s3, 4
      %s222 = int_to_ptr.hbm [resolvable:$true] %s221
      %224 = dma.vmem_to_hbm [thread:$0]  %s220, 256, %s222, [#allocation4]
    $region29: #{tpu_custom_call.1} parent=1 // pred_fallthru
      _
    // Predicated region
    $region30: #{tpu_custom_call.1} parent=1 // pred_check
      _
    $region31: #{tpu_custom_call.1} parent=1 // pred_check_branch
      %226 = sbr.rel (0) target = $region33
    $region32: #{tpu_custom_call.1} parent=1 // pred_region
      %228 = dma.done [#allocation4], 256
    $region33: #{tpu_custom_call.1} parent=1 // pred_fallthru
      _
    %229 = vsyncpa [#allocation3], 1
    %230 = vsyncpa [#allocation6], 1
    %231 = vsyncpa [#allocation4], 1

</llo_original>
